<compile_context>
chip_gen: v6e
topology: v6e:2x2x1
jax: 0.10.0
libtpu: 0.0.40
codegen_flags: <defaults>
</compile_context>

<pallas_src>
import functools

import jax
import jax.numpy as jnp
from jax.experimental import pallas as pl
from jax.experimental.pallas import tpu as pltpu


def _layernorm_kernel(x_ref, g_ref, b_ref, o_ref, *, eps, f_valid):
    # x_ref: (ROW_TILE, F_pad); g_ref/b_ref: (1, F_pad) float32.
    x = x_ref[...].astype(jnp.float32)
    f_pad = x.shape[-1]

    if f_valid != f_pad:
        lane = jax.lax.broadcasted_iota(jnp.int32, x.shape, dimension=1)
        valid = lane < f_valid
        x = jnp.where(valid, x, 0.0)

    # mean / unbiased std over the REAL feature count only.
    mean = jnp.sum(x, axis=-1, keepdims=True) * jnp.float32(1.0 / f_valid)
    diff = x - mean
    if f_valid != f_pad:
        diff_m = jnp.where(valid, diff, 0.0)
    else:
        diff_m = diff
    var = jnp.sum(diff_m * diff_m, axis=-1, keepdims=True) * jnp.float32(
        1.0 / (f_valid - 1)
    )
    std = jnp.sqrt(var)

    # Per-row reciprocal on the EUP; F-times fewer ops than a full-tile divide.
    inv = pl.reciprocal(std + jnp.float32(eps), approx=False)  # (ROW_TILE, 1)

    g = g_ref[...]  # already f32 (cast in wrapper)
    b = b_ref[...]
    y = g * (diff * inv) + b
    # Pad lanes have g == b == 0, so they write finite zeros (sliced off later).
    o_ref[...] = y.astype(o_ref.dtype)


def _pick_row_tile(f_pad, itemsize, rows):
    # VMEM budget: x-in and out are double-buffered by the pipeline (2 buffers
    # each) plus ~3 f32 working copies in-kernel.  Target ~12 MiB so the same
    # tile choice is safe on v5e (16 MiB scoped default), v6e and v7x.
    budget = 12 * 1024 * 1024
    per_row = f_pad * (4 * itemsize + 3 * 4)
    tile = budget // max(per_row, 1)
    tile = int(max(8, min(1024, (tile // 8) * 8)))
    rows_cap = ((rows + 7) // 8) * 8  # don't allocate blocks far beyond rows
    return min(tile, max(rows_cap, 8))


def layer_norm(x, a_2, b_2, eps=1e-6, row_tile=None,
               vmem_limit_bytes=32 * 1024 * 1024):
    """LayerNorm over the last axis. x: (..., F); a_2, b_2: (F,)."""
    orig_shape = x.shape
    f = orig_shape[-1]
    if f < 2:
        raise ValueError("unbiased std (N-1) requires features >= 2")
    rows = 1
    for d in orig_shape[:-1]:
        rows *= d

    # Flatten leading dims to rows.
    x2 = x.reshape(rows, f)
    g2 = a_2.astype(jnp.float32).reshape(1, f)
    b2 = b_2.astype(jnp.float32).reshape(1, f)

    # Lane-dense feature axis: pad F up to a multiple of 128 when needed
    # (one extra HBM pass only in that case; reductions mask pad lanes).
    f_pad = ((f + 127) // 128) * 128
    if f_pad != f:
        x2 = jnp.pad(x2, ((0, 0), (0, f_pad - f)))
        g2 = jnp.pad(g2, ((0, 0), (0, f_pad - f)))
        b2 = jnp.pad(b2, ((0, 0), (0, f_pad - f)))

    if row_tile is None:
        row_tile = _pick_row_tile(f_pad, jnp.dtype(x.dtype).itemsize, rows)

    grid = (pl.cdiv(rows, row_tile),)  # ragged last block is bounds-masked

    out = pl.pallas_call(
        functools.partial(_layernorm_kernel, eps=eps, f_valid=f),
        out_shape=jax.ShapeDtypeStruct((rows, f_pad), x.dtype),
        grid_spec=pltpu.PrefetchScalarGridSpec(
            num_scalar_prefetch=0,
            grid=grid,
            in_specs=[
                pl.BlockSpec((row_tile, f_pad), lambda i: (i, 0)),
                pl.BlockSpec((1, f_pad), lambda i: (0, 0)),
                pl.BlockSpec((1, f_pad), lambda i: (0, 0)),
            ],
            out_specs=pl.BlockSpec((row_tile, f_pad), lambda i: (i, 0)),
        ),
        compiler_params=pltpu.CompilerParams(
            dimension_semantics=("parallel",),   # shards rows across v7x's 2 TCs
            vmem_limit_bytes=vmem_limit_bytes,
        ),
    )(x2, g2, b2)

    if f_pad != f:
        out = out[:, :f]
    return out.reshape(orig_shape)


if __name__ == "__main__":
    key = jax.random.PRNGKey(0)
    batch, seq, features = 2, 8, 32

    x = jax.random.normal(key, (batch, seq, features), dtype=jnp.float32)

    # Deterministic parameter init, matching nn.Parameter(torch.ones/zeros).
    a_2 = jnp.ones((features,), dtype=jnp.float32)
    b_2 = jnp.zeros((features,), dtype=jnp.float32)
    eps = 1e-6

    out = layer_norm(x, a_2, b_2, eps=eps)
    out = jax.block_until_ready(out)

    # Pure-JAX reference (unbiased std, eps added to std).
    mean = jnp.mean(x, axis=-1, keepdims=True)
    std = jnp.sqrt(
        jnp.sum((x - mean) ** 2, axis=-1, keepdims=True) / (features - 1)
    )
    ref = a_2 * (x - mean) / (std + eps) + b_2

    assert jnp.allclose(out, ref, atol=1e-5, rtol=1e-5), "mismatch vs reference"
    print("KERNEL_OK")
</pallas_src>

<mosaic_0001>
module attributes {stable_mosaic.version = 11 : i64} {
  func.func @_layernorm_kernel(%arg0: i32, %arg1: memref<16x128xf32, #tpu.memory_space<vmem>>, %arg2: memref<1x128xf32, #tpu.memory_space<vmem>>, %arg3: memref<1x128xf32, #tpu.memory_space<vmem>>, %arg4: memref<16x128xf32, #tpu.memory_space<vmem>>) attributes {dimension_semantics = [#tpu.dimension_semantics<parallel>], iteration_bounds = array<i64: 1>, scalar_prefetch = 0 : i64, scratch_operands = 0 : i64, tpu.core_type = #tpu.core_type<tc>, window_params = [{transform_indices = @transform_0, window_bounds = array<i64: 16, 128>}, {pipeline_mode = #tpu.pipeline_mode<synchronous>, transform_indices = @transform_1, window_bounds = array<i64: 1, 128>}, {pipeline_mode = #tpu.pipeline_mode<synchronous>, transform_indices = @transform_2, window_bounds = array<i64: 1, 128>}, {transform_indices = @transform_3, window_bounds = array<i64: 16, 128>}]} {
    %c0 = arith.constant 0 : index
    %c0_0 = arith.constant 0 : index
    %0 = vector.load %arg1[%c0, %c0_0] : memref<16x128xf32, #tpu.memory_space<vmem>>, vector<16x128xf32>
    %1 = tpu.iota {dimensions = array<i32: 1>} : vector<16x128xi32>
    %c32_i32 = arith.constant 32 : i32
    %2 = vector.broadcast %c32_i32 : i32 to vector<16x128xi32>
    %3 = arith.cmpi slt, %1, %2 : vector<16x128xi32>
    %cst = arith.constant 0.000000e+00 : f32
    %4 = vector.broadcast %cst : f32 to vector<16x128xf32>
    %5 = arith.select %3, %0, %4 : vector<16x128xi1>, vector<16x128xf32>
    %cst_1 = arith.constant dense<0.000000e+00> : vector<16xf32>
    %6 = vector.multi_reduction <add>, %5, %cst_1 [1] : vector<16x128xf32> to vector<16xf32>
    %7 = vector.shape_cast %6 : vector<16xf32> to vector<16x1xf32>
    %cst_2 = arith.constant 3.125000e-02 : f32
    %8 = vector.broadcast %cst_2 : f32 to vector<16x1xf32>
    %9 = arith.mulf %7, %8 : vector<16x1xf32>
    %10 = vector.broadcast %9 : vector<16x1xf32> to vector<16x128xf32>
    %11 = arith.subf %5, %10 : vector<16x128xf32>
    %cst_3 = arith.constant 0.000000e+00 : f32
    %12 = vector.broadcast %cst_3 : f32 to vector<16x128xf32>
    %13 = arith.select %3, %11, %12 : vector<16x128xi1>, vector<16x128xf32>
    %14 = arith.mulf %13, %13 : vector<16x128xf32>
    %cst_4 = arith.constant dense<0.000000e+00> : vector<16xf32>
    %15 = vector.multi_reduction <add>, %14, %cst_4 [1] : vector<16x128xf32> to vector<16xf32>
    %16 = vector.shape_cast %15 : vector<16xf32> to vector<16x1xf32>
    %cst_5 = arith.constant 0.0322580636 : f32
    %17 = vector.broadcast %cst_5 : f32 to vector<16x1xf32>
    %18 = arith.mulf %16, %17 : vector<16x1xf32>
    %19 = math.sqrt %18 : vector<16x1xf32>
    %cst_6 = arith.constant 9.99999997E-7 : f32
    %20 = vector.broadcast %cst_6 : f32 to vector<16x1xf32>
    %21 = arith.addf %19, %20 : vector<16x1xf32>
    %22 = tpu.reciprocal %21 : vector<16x1xf32> -> vector<16x1xf32>
    %c0_7 = arith.constant 0 : index
    %c0_8 = arith.constant 0 : index
    %23 = vector.load %arg2[%c0_7, %c0_8] : memref<1x128xf32, #tpu.memory_space<vmem>>, vector<1x128xf32>
    %c0_9 = arith.constant 0 : index
    %c0_10 = arith.constant 0 : index
    %24 = vector.load %arg3[%c0_9, %c0_10] : memref<1x128xf32, #tpu.memory_space<vmem>>, vector<1x128xf32>
    %25 = vector.broadcast %22 : vector<16x1xf32> to vector<16x128xf32>
    %26 = arith.mulf %11, %25 : vector<16x128xf32>
    %27 = vector.broadcast %23 : vector<1x128xf32> to vector<16x128xf32>
    %28 = arith.mulf %27, %26 : vector<16x128xf32>
    %29 = vector.broadcast %24 : vector<1x128xf32> to vector<16x128xf32>
    %30 = arith.addf %28, %29 : vector<16x128xf32>
    %c0_11 = arith.constant 0 : index
    %c0_12 = arith.constant 0 : index
    %31 = vector.load %arg4[%c0_11, %c0_12] : memref<16x128xf32, #tpu.memory_space<vmem>>, vector<16x128xf32>
    tpu.vector_store %arg4[%c0_11, %c0_12], %30 {strides = array<i32>} : memref<16x128xf32, #tpu.memory_space<vmem>>, vector<16x128xf32>,
    return
  }
  func.func @transform_0(%arg0: i32) -> (i32, i32) {
    %c0_i32 = arith.constant 0 : i32
    %c0_i32_0 = arith.constant 0 : i32
    return %arg0, %c0_i32 : i32, i32
  }
  func.func @transform_1(%arg0: i32) -> (i32, i32) {
    %c0_i32 = arith.constant 0 : i32
    %c0_i32_0 = arith.constant 0 : i32
    %c0_i32_1 = arith.constant 0 : i32
    return %c0_i32, %c0_i32_0 : i32, i32
  }
  func.func @transform_2(%arg0: i32) -> (i32, i32) {
    %c0_i32 = arith.constant 0 : i32
    %c0_i32_0 = arith.constant 0 : i32
    %c0_i32_1 = arith.constant 0 : i32
    return %c0_i32, %c0_i32_0 : i32, i32
  }
  func.func @transform_3(%arg0: i32) -> (i32, i32) {
    %c0_i32 = arith.constant 0 : i32
    %c0_i32_0 = arith.constant 0 : i32
    return %arg0, %c0_i32 : i32, i32
  }
}

</mosaic_0001>

<llo_original>
// kernel: tpu_custom_call.1
$region0: #{tpu_custom_call.1}
  #allocation0 [shape = 'u32[]', space=smem, size = 0x4, offset = 0x4, fixed_abs, tag = 'smem constant byte address 0x4 - core index']
  #allocation1 [shape = 'u32[144,128]{1,0:T(1,128)}', space=vmem, size = 0x12000, scoped, tag = 'internal scratch']
  %s0 = inlined_call_operand.hbm [shape: f32[16,128], index: 0, kind: input, shape index: {}]
  %s1 = inlined_call_operand.vmem [shape: f32[1,128], index: 1, kind: input, shape index: {}]
  %s2 = inlined_call_operand.vmem [shape: f32[1,128], index: 2, kind: input, shape index: {}]
  %s3 = inlined_call_operand.hbm [shape: f32[16,128], index: 3, kind: output, shape index: {}]
  %s4 = sld [smem:[#allocation0]]
  $region26: #{tpu_custom_call.1} parent=0
    _
  %s6 = ssub.s32 1, %s4
  %s7 = scalar_select 0, %s6, %s4
  $region1: #{tpu_custom_call.1} parent=0
    #allocation2 [shape = 'u8[8192]{0}', space=vmem, size = 0x2000, scoped, tag = 'input window, operand 0, single buffered']
    #allocation3 [shape = 's32[1]{0}', space=sflag, size = 0x4, scoped, tag = 'scoped memory for tpu_custom_call.1']
    #allocation4 [shape = 's32[1]{0}', space=sflag, size = 0x4, scoped, tag = 'scoped memory for tpu_custom_call.1']
    #allocation5 [shape = 'u8[8192]{0}', space=vmem, size = 0x2000, scoped, tag = 'output window, operand 0, single buffered']
    %8 = vsyncpa [#allocation3], 0
    %9 = vsyncpa [#allocation4], 0
    // Predicated region
    $region2: #{tpu_custom_call.1} parent=1 // pred_check
      _
    $region3: #{tpu_custom_call.1} parent=1 // pred_check_branch
      %11 = sbr.rel (0) target = $region5
    $region4: #{tpu_custom_call.1} parent=1 // pred_region
      %s13 = ssub.s32 256, 256
      %14 = vsyncadd [#allocation3], %s13
      %s15 = sshll.u32 [#allocation2], 4
      %s16 = int_to_ptr.vmem [resolvable:$true] %s15
      %21 = dma.hbm_to_vmem [thread:$0]  %s0, 256, %s16, [#allocation3], 128, 128, 8
    $region5: #{tpu_custom_call.1} parent=1 // pred_fallthru
      _
    // Predicated region
    $region6: #{tpu_custom_call.1} parent=1 // pred_check
      _
    $region7: #{tpu_custom_call.1} parent=1 // pred_check_branch
      %23 = sbr.rel (0) target = $region9
    $region8: #{tpu_custom_call.1} parent=1 // pred_region
      _
    $region9: #{tpu_custom_call.1} parent=1 // pred_fallthru
      _
    // Predicated region
    $region10: #{tpu_custom_call.1} parent=1 // pred_check
      _
    $region11: #{tpu_custom_call.1} parent=1 // pred_check_branch
      %25 = sbr.rel (0) target = $region13
    $region12: #{tpu_custom_call.1} parent=1 // pred_region
      _
    $region13: #{tpu_custom_call.1} parent=1 // pred_fallthru
      _
    // Predicated region
    $region14: #{tpu_custom_call.1} parent=1 // pred_check
      _
    $region15: #{tpu_custom_call.1} parent=1 // pred_check_branch
      %27 = sbr.rel (0) target = $region17
    $region16: #{tpu_custom_call.1} parent=1 // pred_region
      %28 = dma.done [#allocation3], 256
    $region17: #{tpu_custom_call.1} parent=1 // pred_fallthru
      _
    %v29 = vld [vmem:[#allocation2] sm:$0xff]
    %v30 = vld [vmem:[#allocation2 + $0x8] sm:$0xff]
    %v31 = vlaneseq
    %v32 = vand.u32 %v31, 127
    %vm33 = vcmp.lt.s32.totalorder %v32, 32
    %v34 = vsel %vm33, %v29, 0.0
    %v35 = vsel %vm33, %v30, 0.0
    %36 = vadd.xlane.f32.xlu0 %v34
    %v37 = vpop.xlane.xlu0 %36
    %38 = vadd.xlane.f32.xlu0 %v35
    %v39 = vpop.xlane.xlu0 %38
    %v40 = vmul.f32 %v37, 0.03125
    %v41 = vmul.f32 %v39, 0.03125
    %v42 = vsub.f32 %v34, %v40
    %v43 = vsub.f32 %v35, %v41
    %v44 = vsel %vm33, %v42, 0.0
    %v45 = vsel %vm33, %v43, 0.0
    %v46 = vmul.f32 %v44, %v44
    %v47 = vmul.f32 %v45, %v45
    %48 = vadd.xlane.f32.xlu0 %v46
    %v49 = vpop.xlane.xlu0 %48
    %50 = vadd.xlane.f32.xlu0 %v47
    %v51 = vpop.xlane.xlu0 %50
    %v52 = vmul.f32 %v49, 0.032258064
    %v53 = vmul.f32 %v51, 0.032258064
    %v54 = vrsqrt.pop %v52
    %v55 = vmul.f32 %v52, %v54
    %vm56 = vcmp.eq.f32.partialorder %v52, inf
    %v57 = vsel %vm56, %v52, %v55
    %vm58 = vcmp.eq.f32.partialorder %v52, 0.0
    %v59 = vand.u32 %v52, 2147483648
    %v60 = vsel %vm58, %v59, %v57
    %v61 = vrsqrt.pop %v53
    %v62 = vmul.f32 %v53, %v61
    %vm63 = vcmp.eq.f32.partialorder %v53, inf
    %v64 = vsel %vm63, %v53, %v62
    %vm65 = vcmp.eq.f32.partialorder %v53, 0.0
    %v66 = vand.u32 %v53, 2147483648
    %v67 = vsel %vm65, %v66, %v64
    %v68 = vadd.f32 %v60, 1e-06
    %v69 = vadd.f32 %v67, 1e-06
    %v70 = vrcp.pop %v68
    %v71 = vrcp.pop %v69
    %v72 = vld [vmem:[%s1] sm:$0x1]
    %v73 = vld [vmem:[%s2] sm:$0x1]
    %v74 = vmul.f32 %v42, %v70
    %v75 = vmul.f32 %v43, %v71
    %v77 = vlaneseq
    %v78 = vshrl.u32 %v77, 7
    %v79 = vsub.s32 0, %v78
    %v80 = vrot.slane %v72, %v79
    %v82 = vmul.f32 %v80, %v74
    %v83 = vmul.f32 %v80, %v75
    %v85 = vlaneseq
    %v86 = vshrl.u32 %v85, 7
    %v87 = vsub.s32 0, %v86
    %v88 = vrot.slane %v73, %v87
    %v90 = vadd.f32 %v82, %v88
    %v91 = vadd.f32 %v83, %v88
    %92 = vst [vmem:[#allocation5] sm:$0xff] %v90
    %93 = vst [vmem:[#allocation5 + $0x8] sm:$0xff] %v91
    // Predicated region
    $region18: #{tpu_custom_call.1} parent=1 // pred_check
      _
    $region19: #{tpu_custom_call.1} parent=1 // pred_check_branch
      %95 = sbr.rel (0) target = $region21
    $region20: #{tpu_custom_call.1} parent=1 // pred_region
      %s97 = ssub.s32 256, 256
      %98 = vsyncadd [#allocation4], %s97
      %s99 = sshll.u32 [#allocation5], 4
      %s100 = int_to_ptr.vmem [resolvable:$true] %s99
      %105 = dma.vmem_to_hbm [thread:$0]  %s100, 256, %s3, [#allocation4], 128, 128, 8
    $region21: #{tpu_custom_call.1} parent=1 // pred_fallthru
      _
    // Predicated region
    $region22: #{tpu_custom_call.1} parent=1 // pred_check
      _
    $region23: #{tpu_custom_call.1} parent=1 // pred_check_branch
      %107 = sbr.rel (0) target = $region25
    $region24: #{tpu_custom_call.1} parent=1 // pred_region
      %108 = dma.done [#allocation4], 256
    $region25: #{tpu_custom_call.1} parent=1 // pred_fallthru
      _
    %109 = vsyncpa [#allocation3], 1
    %110 = vsyncpa [#allocation4], 1

</llo_original>
